<compile_context>
chip_gen: v5e
topology: v5e:2x2
jax: 0.10.0
libtpu: 0.0.40
codegen_flags: <defaults>
</compile_context>

<pallas_src>
import math
import functools

import jax
import jax.numpy as jnp
from jax.experimental import pallas as pl
from jax.experimental.pallas import tpu as pltpu

# Make the pure-JAX reference / one-time weight folding use full-f32 matmuls
# so the correctness check compares against an accurate baseline.
jax.config.update("jax_default_matmul_precision", "highest")


def _time_embedding_kernel(t_ref, slab_ref, out_ref, *, D):
    # Slab row layout (all f32, lane width D):
    #   [0    : D   )  w_fold  (D, D)  (in, out) = (linear_in o net[0]) folded
    #   [D    : 2D  )  w2_t    (D, D)  (in, out) = net[2] weight
    #   2D             freq    (1, D)  frequencies, repeated for both halves
    #   2D+1           mask    (1, D)  1.0 on sin lanes [0, D/2), 0.0 on cos lanes
    #   2D+2           b_fold  (1, D)
    #   2D+3           b2      (1, D)
    t = t_ref[...]                                    # (B, 1)

    freq = slab_ref[2 * D: 2 * D + 1, :]              # (1, D)
    mask = slab_ref[2 * D + 1: 2 * D + 2, :]          # (1, D)
    b_fold = slab_ref[2 * D + 2: 2 * D + 3, :]        # (1, D)
    b2 = slab_ref[2 * D + 3: 2 * D + 4, :]            # (1, D)

    # Sinusoidal embedding with no cross-lane concatenate: sin on the first
    # half-lanes, cos on the second half (per-lane VPU select, two EUP sweeps).
    arg = t * freq                                    # (B, D)
    emb = jnp.where(mask > 0.5, jnp.sin(arg), jnp.cos(arg))

    # Folded (linear_in o net[0]): one MXU matmul instead of two.
    h = jnp.dot(emb, slab_ref[0:D, :],
                preferred_element_type=jnp.float32) + b_fold

    # net[1]: SiLU
    h = h * jax.nn.sigmoid(h)

    # net[2]: Linear
    out_ref[...] = (jnp.dot(h, slab_ref[D:2 * D, :],
                            preferred_element_type=jnp.float32) + b2)


def prepare_time_embedding_params(params, time_embed_dim):
    """One-time (model-setup) preprocessing of PyTorch-layout parameters.

    Packs every constant (folded weights, biases, frequency table, sin/cos
    lane mask) into ONE (2*D+4, D) f32 slab so the kernel takes exactly two
    inputs (timesteps + slab).  Do NOT call per step.
    """
    D = time_embed_dim
    half_dim = D // 2
    # Guard half_dim == 1 (division by zero in the reference formula for D==2).
    denom = max(half_dim - 1, 1)
    emb_factor = math.log(10000.0) / denom

    freq_half = jnp.exp(jnp.arange(half_dim, dtype=jnp.float32) * (-emb_factor))
    freq_full = jnp.concatenate([freq_half, freq_half]).reshape(1, D)
    sin_mask = jnp.concatenate([jnp.ones((half_dim,), jnp.float32),
                                jnp.zeros((half_dim,), jnp.float32)]).reshape(1, D)

    w_in_t = params["w_in"].astype(jnp.float32).T          # (D, D) (in, out)
    w1_t = params["w1"].astype(jnp.float32).T
    w_fold = w_in_t @ w1_t                                  # fold linear_in with net[0]
    b_fold = (params["b_in"].astype(jnp.float32) @ w1_t
              + params["b1"].astype(jnp.float32)).reshape(1, D)
    w2_t = params["w2"].astype(jnp.float32).T
    b2 = params["b2"].astype(jnp.float32).reshape(1, D)

    slab = jnp.concatenate(
        [w_fold, w2_t, freq_full, sin_mask, b_fold, b2], axis=0)  # (2D+4, D)

    return {"slab": slab, "D": D}


@functools.partial(jax.jit, static_argnames=("D",))
def _time_embedding_call(t2d, slab, D):
    B = t2d.shape[0]
    vmem = pl.BlockSpec(memory_space=pltpu.MemorySpace.VMEM)

    cost = pl.CostEstimate(
        flops=2 * 2 * B * D * D + 8 * B * D,          # 2 matmuls + elementwise
        transcendentals=3 * B * D,                    # sin + cos + sigmoid
        bytes_accessed=4 * (B * 1 + (2 * D + 4) * D + B * D),
    )

    return pl.pallas_call(
        functools.partial(_time_embedding_kernel, D=D),
        out_shape=jax.ShapeDtypeStruct((B, D), jnp.float32),
        in_specs=[vmem, vmem],
        out_specs=vmem,
        cost_estimate=cost,
    )(t2d, slab)


def time_embedding(timesteps, prepared):
    """timesteps: (B, 1) f32 preferred (avoids an extra cast/reshape dispatch);
    a (B,) vector is also accepted.  Returns (B, time_embed_dim) f32."""
    if timesteps.ndim == 1:
        timesteps = timesteps[:, None]
    t2d = timesteps.astype(jnp.float32)
    return _time_embedding_call(t2d, prepared["slab"], D=prepared["D"])


def _reference(timesteps, params, D):
    """Pure-JAX mirror of the PyTorch module (unfolded, direct sin/cos)."""
    half_dim = D // 2
    emb_factor = math.log(10000.0) / (half_dim - 1)
    freq = jnp.exp(jnp.arange(half_dim, dtype=jnp.float32) * (-emb_factor))
    arg = timesteps[:, None] * freq[None, :]
    emb = jnp.concatenate([jnp.sin(arg), jnp.cos(arg)], axis=-1)
    h = emb @ params["w_in"].T + params["b_in"]
    h = h @ params["w1"].T + params["b1"]
    h = h * jax.nn.sigmoid(h)
    return h @ params["w2"].T + params["b2"]


if __name__ == "__main__":
    D = 32   # time_embed_dim
    B = 8    # number of timesteps (batch)

    key = jax.random.PRNGKey(0)
    keys = jax.random.split(key, 7)
    scale = 1.0 / math.sqrt(D)
    params = {
        "w_in": jax.random.normal(keys[0], (D, D), jnp.float32) * scale,
        "b_in": jax.random.normal(keys[1], (D,), jnp.float32) * 0.01,
        "w1":   jax.random.normal(keys[2], (D, D), jnp.float32) * scale,
        "b1":   jax.random.normal(keys[3], (D,), jnp.float32) * 0.01,
        "w2":   jax.random.normal(keys[4], (D, D), jnp.float32) * scale,
        "b2":   jax.random.normal(keys[5], (D,), jnp.float32) * 0.01,
    }
    # Timesteps already shaped (B, 1) f32 by the caller (perf-review item).
    timesteps = jax.random.uniform(keys[6], (B, 1), jnp.float32) * 1000.0

    prepared = prepare_time_embedding_params(params, D)   # one-time setup
    out = time_embedding(timesteps, prepared)
    out = jax.block_until_ready(out)

    ref = _reference(timesteps[:, 0], params, D)
    assert out.shape == (B, D)
    assert jnp.allclose(out, ref, atol=1e-4, rtol=1e-4), "mismatch vs reference"

    print("KERNEL_OK")
</pallas_src>

<mosaic_0001>
module attributes {stable_mosaic.version = 11 : i64} {
  func.func @_time_embedding_kernel(%arg0: memref<8x1xf32, #tpu.memory_space<vmem>>, %arg1: memref<68x32xf32, #tpu.memory_space<vmem>>, %arg2: memref<8x32xf32, #tpu.memory_space<vmem>>) attributes {dimension_semantics = [], scalar_prefetch = 0 : i64, scratch_operands = 0 : i64, tpu.core_type = #tpu.core_type<tc>} {
    %c0 = arith.constant 0 : index
    %c0_0 = arith.constant 0 : index
    %0 = vector.load %arg0[%c0, %c0_0] : memref<8x1xf32, #tpu.memory_space<vmem>>, vector<8x1xf32>
    %c64 = arith.constant 64 : index
    %c0_1 = arith.constant 0 : index
    %1 = vector.load %arg1[%c64, %c0_1] : memref<68x32xf32, #tpu.memory_space<vmem>>, vector<1x32xf32>
    %c65 = arith.constant 65 : index
    %c0_2 = arith.constant 0 : index
    %2 = vector.load %arg1[%c65, %c0_2] : memref<68x32xf32, #tpu.memory_space<vmem>>, vector<1x32xf32>
    %c66 = arith.constant 66 : index
    %c0_3 = arith.constant 0 : index
    %3 = vector.load %arg1[%c66, %c0_3] : memref<68x32xf32, #tpu.memory_space<vmem>>, vector<1x32xf32>
    %c67 = arith.constant 67 : index
    %c0_4 = arith.constant 0 : index
    %4 = vector.load %arg1[%c67, %c0_4] : memref<68x32xf32, #tpu.memory_space<vmem>>, vector<1x32xf32>
    %5 = vector.broadcast %0 : vector<8x1xf32> to vector<8x32xf32>
    %6 = vector.broadcast %1 : vector<1x32xf32> to vector<8x32xf32>
    %7 = arith.mulf %5, %6 : vector<8x32xf32>
    %cst = arith.constant 5.000000e-01 : f32
    %8 = vector.broadcast %cst : f32 to vector<1x32xf32>
    %9 = arith.cmpf ogt, %2, %8 : vector<1x32xf32>
    %10 = math.sin %7 : vector<8x32xf32>
    %11 = math.cos %7 : vector<8x32xf32>
    %12 = vector.shape_cast %9 : vector<1x32xi1> to vector<1x32xi1>
    %13 = vector.broadcast %12 : vector<1x32xi1> to vector<8x32xi1>
    %14 = arith.select %13, %10, %11 : vector<8x32xi1>, vector<8x32xf32>
    %c0_5 = arith.constant 0 : index
    %c0_6 = arith.constant 0 : index
    %15 = vector.load %arg1[%c0_5, %c0_6] : memref<68x32xf32, #tpu.memory_space<vmem>>, vector<32x32xf32>
    %cst_7 = arith.constant dense<0.000000e+00> : vector<8x32xf32>
    %16 = tpu.matmul %14, %15, %cst_7 {dimension_numbers = #tpu.dot_dimension_numbers<[1], [0], [0], [1], [0, 0, 1, 1], [], []>, precision = #tpu.contract_precision<fp32>} : vector<8x32xf32>, vector<32x32xf32>, vector<8x32xf32> -> vector<8x32xf32>
    %17 = vector.broadcast %3 : vector<1x32xf32> to vector<8x32xf32>
    %18 = arith.addf %16, %17 : vector<8x32xf32>
    %19 = arith.negf %18 : vector<8x32xf32>
    %20 = math.exp %19 : vector<8x32xf32>
    %cst_8 = arith.constant 1.000000e+00 : f32
    %21 = vector.broadcast %cst_8 : f32 to vector<8x32xf32>
    %22 = arith.addf %21, %20 : vector<8x32xf32>
    %23 = arith.divf %21, %22 : vector<8x32xf32>
    %24 = arith.mulf %18, %23 : vector<8x32xf32>
    %c32 = arith.constant 32 : index
    %c0_9 = arith.constant 0 : index
    %25 = vector.load %arg1[%c32, %c0_9] : memref<68x32xf32, #tpu.memory_space<vmem>>, vector<32x32xf32>
    %cst_10 = arith.constant dense<0.000000e+00> : vector<8x32xf32>
    %26 = tpu.matmul %24, %25, %cst_10 {dimension_numbers = #tpu.dot_dimension_numbers<[1], [0], [0], [1], [0, 0, 1, 1], [], []>, precision = #tpu.contract_precision<fp32>} : vector<8x32xf32>, vector<32x32xf32>, vector<8x32xf32> -> vector<8x32xf32>
    %27 = vector.broadcast %4 : vector<1x32xf32> to vector<8x32xf32>
    %28 = arith.addf %26, %27 : vector<8x32xf32>
    %c0_11 = arith.constant 0 : index
    %c0_12 = arith.constant 0 : index
    %29 = vector.load %arg2[%c0_11, %c0_12] : memref<8x32xf32, #tpu.memory_space<vmem>>, vector<8x32xf32>
    tpu.vector_store %arg2[%c0_11, %c0_12], %28 {strides = array<i32>} : memref<8x32xf32, #tpu.memory_space<vmem>>, vector<8x32xf32>,
    return
  }
}

</mosaic_0001>

<llo_original>
// kernel: _time_embedding_call.1
$region0: #{_time_embedding_call.1}
  #allocation0 [shape = 'u32[]', space=smem, size = 0x4, offset = 0x4, fixed_abs, tag = 'smem constant byte address 0x4 - core index']
  #allocation1 [shape = 'u32[72,128]{1,0:T(1,128)}', space=vmem, size = 0x9000, scoped, tag = 'internal scratch']
  %s0 = inlined_call_operand.vmem [shape: f32[8,1], index: 0, kind: input, shape index: {}]
  %s1 = inlined_call_operand.vmem [shape: f32[68,32], index: 1, kind: input, shape index: {}]
  %s2 = inlined_call_operand.hbm [shape: f32[8,32], index: 2, kind: output, shape index: {}]
  %s3 = sld [smem:[#allocation0]]
  $region18: #{_time_embedding_call.1} parent=0
    _
  %s5 = ssub.s32 1, %s3
  %s6 = scalar_select 0, %s5, %s3
  $region1: #{_time_embedding_call.1} parent=0
    #allocation2 [shape = 'u8[4096]{0}', space=vmem, size = 0x1000, scoped, tag = 'output window, operand 0, single buffered']
    #allocation3 [shape = 's32[1]{0}', space=sflag, size = 0x4, scoped, tag = 'scoped memory for _time_embedding_call.1']
    %7 = vsyncpa [#allocation3], 0
    // Predicated region
    $region2: #{_time_embedding_call.1} parent=1 // pred_check
      _
    $region3: #{_time_embedding_call.1} parent=1 // pred_check_branch
      %9 = sbr.rel (0) target = $region5
    $region4: #{_time_embedding_call.1} parent=1 // pred_region
      _
    $region5: #{_time_embedding_call.1} parent=1 // pred_fallthru
      _
    // Predicated region
    $region6: #{_time_embedding_call.1} parent=1 // pred_check
      _
    $region7: #{_time_embedding_call.1} parent=1 // pred_check_branch
      %11 = sbr.rel (0) target = $region9
    $region8: #{_time_embedding_call.1} parent=1 // pred_region
      _
    $region9: #{_time_embedding_call.1} parent=1 // pred_fallthru
      _
    %v12 = vld [vmem:[%s0] sm:$0xff]
    %v13 = vld [vmem:[%s1 + $0x40] sm:$0x1]
    %v14 = vld [vmem:[%s1 + $0x41] sm:$0x1]
    %v15 = vld [vmem:[%s1 + $0x42] sm:$0x1]
    %v16 = vld [vmem:[%s1 + $0x43] sm:$0x1]
    %18 = vset.pattern.permute.xlu0 0
    %19 = vperm.xlu0 %18, %v12
    %v20 = vpop.permute.xlu0 %19
    %v22 = vperm.slane %v13, 0
    %v23 = vmul.f32 %v20, %v22
    %vm24 = vcmp.gt.f32.partialorder %v14, 0.5
    %v25 = vand.u32 2147483647, %v23
    %vm26 = vcmp.le.f32.partialorder %v25, 0.7853982
    %vm27 = vcmp.lt.s32.totalorder %v23, 0
    %v28 = vand.u32 %v23, 2139095040
    %v29 = vshrl.u32 %v28, 23
    %v30 = vsub.s32 %v29, 127
    %v31 = vand.u32 2147483647, %v23
    %v32 = vand.u32 %v31, 8388607
    %v33 = vor.u32 %v32, 8388608
    %v34 = vsub.s32 0, %v33
    %v35 = vadd.s32 %v30, 1
    %vm36 = vcmp.gt.s32.totalorder %v35, 0
    %v37 = vsel %vm36, %v35, 0
    %v38 = vshrl.u32 %v37, 5
    %v39 = vand.u32 %v37, 31
    %v40 = vsub.s32 32, %v39
    %v41 = vshrl.u32 683565275, %v40
    %v42 = vshll.u32 683565275, %v39
    %v43 = vshrl.u32 2475754826, %v40
    %v44 = vor.u32 %v42, %v43
    %v45 = vshll.u32 2475754826, %v39
    %v46 = vshrl.u32 2131351028, %v40
    %v47 = vor.u32 %v45, %v46
    %v48 = vshll.u32 2131351028, %v39
    %v49 = vshrl.u32 2102212464, %v40
    %v50 = vor.u32 %v48, %v49
    %v51 = vshll.u32 2102212464, %v39
    %v52 = vshrl.u32 920167782, %v40
    %v53 = vor.u32 %v51, %v52
    %v54 = vshll.u32 920167782, %v39
    %v55 = vshrl.u32 1326507024, %v40
    %v56 = vor.u32 %v54, %v55
    %vm57 = vcmp.lt.s32.totalorder %v38, 1
    %vm58 = vcmp.lt.s32.totalorder %v38, 2
    %vm59 = vcmp.lt.s32.totalorder %v38, 3
    %vm60 = vcmp.lt.s32.totalorder %v38, 4
    %v61 = vsel %vm57, %v41, %v44
    %v62 = vsel %vm60, %v50, 2102212464
    %v63 = vsel %vm59, %v47, %v62
    %v64 = vsel %vm58, %v61, %v63
    %v65 = vsel %vm57, %v44, %v47
    %v66 = vsel %vm60, %v53, 920167782
    %v67 = vsel %vm59, %v50, %v66
    %v68 = vsel %vm58, %v65, %v67
    %v69 = vsel %vm57, %v47, %v50
    %v70 = vsel %vm60, %v56, 1326507024
    %v71 = vsel %vm59, %v53, %v70
    %v72 = vsel %vm58, %v69, %v71
    %v73 = vshll.u32 %v33, 8
    %v74 = vand.u32 %v73, 65535
    %v75 = vshrl.u32 %v73, 16
    %v76 = vand.u32 %v72, 65535
    %v77 = vshrl.u32 %v72, 16
    %v78 = vmul.u32 %v74, %v76
    %v79 = vmul.u32 %v74, %v77
    %v80 = vmul.u32 %v75, %v76
    %v81 = vmul.u32 %v75, %v77
    %v82 = vshll.u32 %v79, 16
    %v83 = vshrl.u32 %v79, 16
    %v84 = vshll.u32 %v80, 16
    %v85 = vshrl.u32 %v80, 16
    %vm86 = vc.u32 %v78, %v82
    %v87 = vsel %vm86, 1, 0
    %v88 = vadd.s32 %v78, %v82
    %v89 = vadd.s32 %v81, %v87
    %vm90 = vc.u32 %v88, %v84
    %v91 = vsel %vm90, 1, 0
    %v92 = vadd.s32 %v88, %v84
    %v93 = vadd.s32 %v89, %v91
    %v94 = vadd.s32 %v93, %v83
    %v95 = vadd.s32 %v94, %v85
    %v96 = vand.u32 %v73, 65535
    %v97 = vshrl.u32 %v73, 16
    %v98 = vand.u32 %v68, 65535
    %v99 = vshrl.u32 %v68, 16
    %v100 = vmul.u32 %v96, %v98
    %v101 = vmul.u32 %v96, %v99
    %v102 = vmul.u32 %v97, %v98
    %v103 = vmul.u32 %v97, %v99
    %v104 = vshll.u32 %v101, 16
    %v105 = vshrl.u32 %v101, 16
    %v106 = vshll.u32 %v102, 16
    %v107 = vshrl.u32 %v102, 16
    %vm108 = vc.u32 %v100, %v104
    %v109 = vsel %vm108, 1, 0
    %v110 = vadd.s32 %v100, %v104
    %v111 = vadd.s32 %v103, %v109
    %vm112 = vc.u32 %v110, %v106
    %v113 = vsel %vm112, 1, 0
    %v114 = vadd.s32 %v110, %v106
    %v115 = vadd.s32 %v111, %v113
    %v116 = vadd.s32 %v115, %v105
    %v117 = vadd.s32 %v116, %v107
    %v118 = vmul.u32 %v73, %v64
    %v119 = vadd.s32 %v95, %v114
    %vm120 = vc.u32 %v95, %v114
    %v121 = vadd.s32 %v117, 1
    %v122 = vsel %vm120, %v121, %v117
    %v123 = vadd.s32 %v118, %v122
    %v124 = vadd.s32 %v123, 536870912
    %v125 = vshrl.u32 %v124, 30
    %v126 = vshll.u32 %v125, 30
    %v127 = vsub.s32 %v123, %v126
    %vm128 = vcmp.lt.s32.totalorder %v127, 0
    %v129 = vsub.s32 0, %v127
    %v130 = vsel %vm128, %v129, %v127
    %v131 = vclz %v130
    %v132 = vsub.s32 %v131, 2
    %vm133 = vcmp.gt.s32.totalorder 0, %v132
    %v134 = vsel %vm133, 0, %v132
    %v135 = vsub.s32 32, %v134
    %v136 = vshll.u32 %v127, %v134
    %v137 = vshrl.u32 %v119, %v135
    %v138 = vor.u32 %v136, %v137
    %v139 = vsub.s32 4294967266, %v134
    %v140 = vadd.s32 %v139, 127
    %v141 = vshll.u32 %v140, 23
    %v142 = vor.u32 4788187, %v141
    %v143 = vand.u32 2147483647, %v142
    %v145 = vcvt.s32.f32 %v138
    %v146 = vmul.f32 %v145, %v143
    %v147 = vxor.u32 %v146, 2147483648
    %v148 = vsel %vm27, %v147, %v146
    %v149 = vsub.s32 4, %v125
    %v150 = vsel %vm27, %v149, %v125
    %v151 = vsel %vm26, %v23, %v148
    %v152 = vsel %vm26, 0, %v150
    %v153 = vmul.f32 %v151, %v151
    %v154 = vmul.f32 %v153, -0.001358992
    %v155 = vadd.f32 %v154, 0.041655596
    %v156 = vmul.f32 %v153, %v155
    %v157 = vadd.f32 %v156, -0.4999988
    %v158 = vmul.f32 %v153, %v157
    %v159 = vadd.f32 1.0, %v158
    %v160 = vmul.f32 %v151, %v151
    %v161 = vmul.f32 %v160, -0.00019511016
    %v162 = vadd.f32 %v161, 0.008332121
    %v163 = vmul.f32 %v160, %v162
    %v164 = vadd.f32 %v163, -0.16666654
    %v165 = vmul.f32 %v160, %v164
    %v166 = vadd.f32 %v165, 1.0
    %v167 = vmul.f32 %v166, %v151
    %vm168 = vweird.f32 %v23
    %v169 = vadd.s32 %v152, 3
    %v170 = vand.u32 %v169, 3
    %vm171 = vcmp.lt.s32.totalorder %v170, 2
    %vm172 = vcmp.eq.s32.totalorder %v170, 0
    %v173 = vxor.u32 %v167, 2147483648
    %v174 = vsel %vm172, %v159, %v173
    %vm175 = vcmp.eq.s32.totalorder %v170, 2
    %v176 = vxor.u32 %v159, 2147483648
    %v177 = vsel %vm175, %v176, %v167
    %v178 = vsel %vm171, %v174, %v177
    %v179 = vsel %vm168, nan, %v178
    %v180 = vand.u32 2147483647, %v23
    %vm181 = vcmp.le.f32.partialorder %v180, 0.7853982
    %vm182 = vcmp.lt.s32.totalorder %v23, 0
    %v183 = vand.u32 %v23, 2139095040
    %v184 = vshrl.u32 %v183, 23
    %v185 = vsub.s32 %v184, 127
    %v186 = vand.u32 2147483647, %v23
    %v187 = vand.u32 %v186, 8388607
    %v188 = vor.u32 %v187, 8388608
    %v189 = vsub.s32 0, %v188
    %v190 = vadd.s32 %v185, 1
    %vm191 = vcmp.gt.s32.totalorder %v190, 0
    %v192 = vsel %vm191, %v190, 0
    %v193 = vshrl.u32 %v192, 5
    %v194 = vand.u32 %v192, 31
    %v195 = vsub.s32 32, %v194
    %v196 = vshrl.u32 683565275, %v195
    %v197 = vshll.u32 683565275, %v194
    %v198 = vshrl.u32 2475754826, %v195
    %v199 = vor.u32 %v197, %v198
    %v200 = vshll.u32 2475754826, %v194
    %v201 = vshrl.u32 2131351028, %v195
    %v202 = vor.u32 %v200, %v201
    %v203 = vshll.u32 2131351028, %v194
    %v204 = vshrl.u32 2102212464, %v195
    %v205 = vor.u32 %v203, %v204
    %v206 = vshll.u32 2102212464, %v194
    %v207 = vshrl.u32 920167782, %v195
    %v208 = vor.u32 %v206, %v207
    %v209 = vshll.u32 920167782, %v194
    %v210 = vshrl.u32 1326507024, %v195
    %v211 = vor.u32 %v209, %v210
    %vm212 = vcmp.lt.s32.totalorder %v193, 1
    %vm213 = vcmp.lt.s32.totalorder %v193, 2
    %vm214 = vcmp.lt.s32.totalorder %v193, 3
    %vm215 = vcmp.lt.s32.totalorder %v193, 4
    %v216 = vsel %vm212, %v196, %v199
    %v217 = vsel %vm215, %v205, 2102212464
    %v218 = vsel %vm214, %v202, %v217
    %v219 = vsel %vm213, %v216, %v218
    %v220 = vsel %vm212, %v199, %v202
    %v221 = vsel %vm215, %v208, 920167782
    %v222 = vsel %vm214, %v205, %v221
    %v223 = vsel %vm213, %v220, %v222
    %v224 = vsel %vm212, %v202, %v205
    %v225 = vsel %vm215, %v211, 1326507024
    %v226 = vsel %vm214, %v208, %v225
    %v227 = vsel %vm213, %v224, %v226
    %v228 = vshll.u32 %v188, 8
    %v229 = vand.u32 %v228, 65535
    %v230 = vshrl.u32 %v228, 16
    %v231 = vand.u32 %v227, 65535
    %v232 = vshrl.u32 %v227, 16
    %v233 = vmul.u32 %v229, %v231
    %v234 = vmul.u32 %v229, %v232
    %v235 = vmul.u32 %v230, %v231
    %v236 = vmul.u32 %v230, %v232
    %v237 = vshll.u32 %v234, 16
    %v238 = vshrl.u32 %v234, 16
    %v239 = vshll.u32 %v235, 16
    %v240 = vshrl.u32 %v235, 16
    %vm241 = vc.u32 %v233, %v237
    %v242 = vsel %vm241, 1, 0
    %v243 = vadd.s32 %v233, %v237
    %v244 = vadd.s32 %v236, %v242
    %vm245 = vc.u32 %v243, %v239
    %v246 = vsel %vm245, 1, 0
    %v247 = vadd.s32 %v243, %v239
    %v248 = vadd.s32 %v244, %v246
    %v249 = vadd.s32 %v248, %v238
    %v250 = vadd.s32 %v249, %v240
    %v251 = vand.u32 %v228, 65535
    %v252 = vshrl.u32 %v228, 16
    %v253 = vand.u32 %v223, 65535
    %v254 = vshrl.u32 %v223, 16
    %v255 = vmul.u32 %v251, %v253
    %v256 = vmul.u32 %v251, %v254
    %v257 = vmul.u32 %v252, %v253
    %v258 = vmul.u32 %v252, %v254
    %v259 = vshll.u32 %v256, 16
    %v260 = vshrl.u32 %v256, 16
    %v261 = vshll.u32 %v257, 16
    %v262 = vshrl.u32 %v257, 16
    %vm263 = vc.u32 %v255, %v259
    %v264 = vsel %vm263, 1, 0
    %v265 = vadd.s32 %v255, %v259
    %v266 = vadd.s32 %v258, %v264
    %vm267 = vc.u32 %v265, %v261
    %v268 = vsel %vm267, 1, 0
    %v269 = vadd.s32 %v265, %v261
    %v270 = vadd.s32 %v266, %v268
    %v271 = vadd.s32 %v270, %v260
    %v272 = vadd.s32 %v271, %v262
    %v273 = vmul.u32 %v228, %v219
    %v274 = vadd.s32 %v250, %v269
    %vm275 = vc.u32 %v250, %v269
    %v276 = vadd.s32 %v272, 1
    %v277 = vsel %vm275, %v276, %v272
    %v278 = vadd.s32 %v273, %v277
    %v279 = vadd.s32 %v278, 536870912
    %v280 = vshrl.u32 %v279, 30
    %v281 = vshll.u32 %v280, 30
    %v282 = vsub.s32 %v278, %v281
    %vm283 = vcmp.lt.s32.totalorder %v282, 0
    %v284 = vsub.s32 0, %v282
    %v285 = vsel %vm283, %v284, %v282
    %v286 = vclz %v285
    %v287 = vsub.s32 %v286, 2
    %vm288 = vcmp.gt.s32.totalorder 0, %v287
    %v289 = vsel %vm288, 0, %v287
    %v290 = vsub.s32 32, %v289
    %v291 = vshll.u32 %v282, %v289
    %v292 = vshrl.u32 %v274, %v290
    %v293 = vor.u32 %v291, %v292
    %v294 = vsub.s32 4294967266, %v289
    %v295 = vadd.s32 %v294, 127
    %v296 = vshll.u32 %v295, 23
    %v297 = vor.u32 4788187, %v296
    %v298 = vand.u32 2147483647, %v297
    %v300 = vcvt.s32.f32 %v293
    %v301 = vmul.f32 %v300, %v298
    %v302 = vxor.u32 %v301, 2147483648
    %v303 = vsel %vm182, %v302, %v301
    %v304 = vsub.s32 4, %v280
    %v305 = vsel %vm182, %v304, %v280
    %v306 = vsel %vm181, %v23, %v303
    %v307 = vsel %vm181, 0, %v305
    %v308 = vmul.f32 %v306, %v306
    %v309 = vmul.f32 %v308, -0.001358992
    %v310 = vadd.f32 %v309, 0.041655596
    %v311 = vmul.f32 %v308, %v310
    %v312 = vadd.f32 %v311, -0.4999988
    %v313 = vmul.f32 %v308, %v312
    %v314 = vadd.f32 1.0, %v313
    %v315 = vmul.f32 %v306, %v306
    %v316 = vmul.f32 %v315, -0.00019511016
    %v317 = vadd.f32 %v316, 0.008332121
    %v318 = vmul.f32 %v315, %v317
    %v319 = vadd.f32 %v318, -0.16666654
    %v320 = vmul.f32 %v315, %v319
    %v321 = vadd.f32 %v320, 1.0
    %v322 = vmul.f32 %v321, %v306
    %vm323 = vweird.f32 %v23
    %v324 = vand.u32 %v307, 3
    %vm325 = vcmp.lt.s32.totalorder %v324, 2
    %vm326 = vcmp.eq.s32.totalorder %v324, 0
    %v327 = vxor.u32 %v322, 2147483648
    %v328 = vsel %vm326, %v314, %v327
    %vm329 = vcmp.eq.s32.totalorder %v324, 2
    %v330 = vxor.u32 %v314, 2147483648
    %v331 = vsel %vm329, %v330, %v322
    %v332 = vsel %vm325, %v328, %v331
    %v333 = vsel %vm323, nan, %v332
    %v334 = vsel %vm24, 1, 0
    %v335 = vperm.slane %v334, 0
    %vm336 = vcmp.eq.s32.totalorder %v335, 1
    %v337 = vsel %vm336, %v179, %v333
    %v338 = vld [vmem:[%s1] sm:$0xff]
    %v339 = vld [vmem:[%s1 + $0x8] sm:$0xff]
    %v340 = vld [vmem:[%s1 + $0x10] sm:$0xff]
    %v341 = vld [vmem:[%s1 + $0x18] sm:$0xff]
    %v342 = vperm.slane %v15, 0
    %vm343 = vcmask 261120
    %v345 = vsel %vm343, %v337, 0
    %347 = vmatpush.msra.mxu0 0.0
    %348 = vmatpush.msra.mxu0 0.0
    %349 = vmatpush.msra.mxu0 0.0
    %350 = vmatpush.msra.mxu0 0.0
    %351 = vmatpush.msra.mxu0 0.0
    %352 = vmatpush.msra.mxu0 0.0
    %353 = vmatpush.msra.mxu0 0.0
    %354 = vmatpush.msra.mxu0 0.0
    %355 = vmatpush.msra.mxu0 0.0
    %356 = vmatpush.msra.mxu0 0.0
    %357 = vmatpush.msra.mxu0 0.0
    %358 = vmatpush.msra.mxu0 0.0
    %v359 = vand.u32 %v341, 4294901760
    %360 = vmatpush.msra.mxu0 %v359
    %v361 = vand.u32 %v340, 4294901760
    %362 = vmatpush.msra.mxu0 %v361
    %v363 = vand.u32 %v339, 4294901760
    %364 = vmatpush.msra.mxu0 %v363
    %v365 = vand.u32 %v338, 4294901760
    %366 = vmatpush.msra.mxu0 %v365
    %v367 = vand.u32 %v345, 4294901760
    %v368 = vsub.f32 %v345, %v367
    %v369 = vand.u32 %v368, 4294901760
    %v370 = vsub.f32 %v368, %v369
    %v371 = vand.u32 %v370, 4294901760
    %372 = vmatmul.f32.gmra.mxu0 %v371
    %v373 = vpop.f32.mrf.mxu0
    %v374 = vadd.f32 %v342, %v373
    %375 = vdwg.mxu0
    %376 = vmatpush.msra.mxu0 0.0
    %377 = vmatpush.msra.mxu0 0.0
    %378 = vmatpush.msra.mxu0 0.0
    %379 = vmatpush.msra.mxu0 0.0
    %380 = vmatpush.msra.mxu0 0.0
    %381 = vmatpush.msra.mxu0 0.0
    %382 = vmatpush.msra.mxu0 0.0
    %383 = vmatpush.msra.mxu0 0.0
    %384 = vmatpush.msra.mxu0 0.0
    %385 = vmatpush.msra.mxu0 0.0
    %386 = vmatpush.msra.mxu0 0.0
    %387 = vmatpush.msra.mxu0 0.0
    %v388 = vand.u32 %v341, 4294901760
    %v389 = vsub.f32 %v341, %v388
    %v390 = vand.u32 %v389, 4294901760
    %v391 = vsub.f32 %v389, %v390
    %v392 = vand.u32 %v391, 4294901760
    %393 = vmatpush.msra.mxu0 %v392
    %v394 = vand.u32 %v340, 4294901760
    %v395 = vsub.f32 %v340, %v394
    %v396 = vand.u32 %v395, 4294901760
    %v397 = vsub.f32 %v395, %v396
    %v398 = vand.u32 %v397, 4294901760
    %399 = vmatpush.msra.mxu0 %v398
    %v400 = vand.u32 %v339, 4294901760
    %v401 = vsub.f32 %v339, %v400
    %v402 = vand.u32 %v401, 4294901760
    %v403 = vsub.f32 %v401, %v402
    %v404 = vand.u32 %v403, 4294901760
    %405 = vmatpush.msra.mxu0 %v404
    %v406 = vand.u32 %v338, 4294901760
    %v407 = vsub.f32 %v338, %v406
    %v408 = vand.u32 %v407, 4294901760
    %v409 = vsub.f32 %v407, %v408
    %v410 = vand.u32 %v409, 4294901760
    %411 = vmatpush.msra.mxu0 %v410
    %v412 = vand.u32 %v345, 4294901760
    %413 = vmatmul.f32.gmra.mxu0 %v412
    %v414 = vpop.f32.mrf.mxu0
    %v415 = vadd.f32 %v374, %v414
    %416 = vdwg.mxu0
    %417 = vmatpush.msra.mxu0 0.0
    %418 = vmatpush.msra.mxu0 0.0
    %419 = vmatpush.msra.mxu0 0.0
    %420 = vmatpush.msra.mxu0 0.0
    %421 = vmatpush.msra.mxu0 0.0
    %422 = vmatpush.msra.mxu0 0.0
    %423 = vmatpush.msra.mxu0 0.0
    %424 = vmatpush.msra.mxu0 0.0
    %425 = vmatpush.msra.mxu0 0.0
    %426 = vmatpush.msra.mxu0 0.0
    %427 = vmatpush.msra.mxu0 0.0
    %428 = vmatpush.msra.mxu0 0.0
    %v429 = vand.u32 %v341, 4294901760
    %v430 = vsub.f32 %v341, %v429
    %431 = vmatpush.msra.mxu0 %v430
    %v432 = vand.u32 %v340, 4294901760
    %v433 = vsub.f32 %v340, %v432
    %434 = vmatpush.msra.mxu0 %v433
    %v435 = vand.u32 %v339, 4294901760
    %v436 = vsub.f32 %v339, %v435
    %437 = vmatpush.msra.mxu0 %v436
    %v438 = vand.u32 %v338, 4294901760
    %v439 = vsub.f32 %v338, %v438
    %440 = vmatpush.msra.mxu0 %v439
    %v441 = vand.u32 %v345, 4294901760
    %v442 = vsub.f32 %v345, %v441
    %443 = vmatmul.f32.gmra.mxu0 %v442
    %v444 = vpop.f32.mrf.mxu0
    %v445 = vadd.f32 %v415, %v444
    %446 = vdwg.mxu0
    %447 = vmatpush.msra.mxu0 0.0
    %448 = vmatpush.msra.mxu0 0.0
    %449 = vmatpush.msra.mxu0 0.0
    %450 = vmatpush.msra.mxu0 0.0
    %451 = vmatpush.msra.mxu0 0.0
    %452 = vmatpush.msra.mxu0 0.0
    %453 = vmatpush.msra.mxu0 0.0
    %454 = vmatpush.msra.mxu0 0.0
    %455 = vmatpush.msra.mxu0 0.0
    %456 = vmatpush.msra.mxu0 0.0
    %457 = vmatpush.msra.mxu0 0.0
    %458 = vmatpush.msra.mxu0 0.0
    %v459 = vand.u32 %v341, 4294901760
    %460 = vmatpush.msra.mxu0 %v459
    %v461 = vand.u32 %v340, 4294901760
    %462 = vmatpush.msra.mxu0 %v461
    %v463 = vand.u32 %v339, 4294901760
    %464 = vmatpush.msra.mxu0 %v463
    %v465 = vand.u32 %v338, 4294901760
    %466 = vmatpush.msra.mxu0 %v465
    %v467 = vand.u32 %v345, 4294901760
    %v468 = vsub.f32 %v345, %v467
    %v469 = vand.u32 %v468, 4294901760
    %470 = vmatmul.f32.gmra.mxu0 %v469
    %v471 = vpop.f32.mrf.mxu0
    %v472 = vadd.f32 %v445, %v471
    %473 = vdwg.mxu0
    %474 = vmatpush.msra.mxu0 0.0
    %475 = vmatpush.msra.mxu0 0.0
    %476 = vmatpush.msra.mxu0 0.0
    %477 = vmatpush.msra.mxu0 0.0
    %478 = vmatpush.msra.mxu0 0.0
    %479 = vmatpush.msra.mxu0 0.0
    %480 = vmatpush.msra.mxu0 0.0
    %481 = vmatpush.msra.mxu0 0.0
    %482 = vmatpush.msra.mxu0 0.0
    %483 = vmatpush.msra.mxu0 0.0
    %484 = vmatpush.msra.mxu0 0.0
    %485 = vmatpush.msra.mxu0 0.0
    %v486 = vand.u32 %v341, 4294901760
    %v487 = vsub.f32 %v341, %v486
    %v488 = vand.u32 %v487, 4294901760
    %489 = vmatpush.msra.mxu0 %v488
    %v490 = vand.u32 %v340, 4294901760
    %v491 = vsub.f32 %v340, %v490
    %v492 = vand.u32 %v491, 4294901760
    %493 = vmatpush.msra.mxu0 %v492
    %v494 = vand.u32 %v339, 4294901760
    %v495 = vsub.f32 %v339, %v494
    %v496 = vand.u32 %v495, 4294901760
    %497 = vmatpush.msra.mxu0 %v496
    %v498 = vand.u32 %v338, 4294901760
    %v499 = vsub.f32 %v338, %v498
    %v500 = vand.u32 %v499, 4294901760
    %501 = vmatpush.msra.mxu0 %v500
    %v502 = vand.u32 %v345, 4294901760
    %503 = vmatmul.f32.gmra.mxu0 %v502
    %v504 = vpop.f32.mrf.mxu0
    %v505 = vadd.f32 %v472, %v504
    %506 = vdwg.mxu0
    %507 = vmatpush.msra.mxu0 0.0
    %508 = vmatpush.msra.mxu0 0.0
    %509 = vmatpush.msra.mxu0 0.0
    %510 = vmatpush.msra.mxu0 0.0
    %511 = vmatpush.msra.mxu0 0.0
    %512 = vmatpush.msra.mxu0 0.0
    %513 = vmatpush.msra.mxu0 0.0
    %514 = vmatpush.msra.mxu0 0.0
    %515 = vmatpush.msra.mxu0 0.0
    %516 = vmatpush.msra.mxu0 0.0
    %517 = vmatpush.msra.mxu0 0.0
    %518 = vmatpush.msra.mxu0 0.0
    %v519 = vand.u32 %v341, 4294901760
    %520 = vmatpush.msra.mxu0 %v519
    %v521 = vand.u32 %v340, 4294901760
    %522 = vmatpush.msra.mxu0 %v521
    %v523 = vand.u32 %v339, 4294901760
    %524 = vmatpush.msra.mxu0 %v523
    %v525 = vand.u32 %v338, 4294901760
    %526 = vmatpush.msra.mxu0 %v525
    %v527 = vand.u32 %v345, 4294901760
    %528 = vmatmul.f32.gmra.mxu0 %v527
    %v529 = vpop.f32.mrf.mxu0
    %v530 = vadd.f32 %v505, %v529
    %531 = vdwg.mxu0
    %v532 = vxor.u32 %v530, 2147483648
    %v533 = vmul.f32 %v532, 1.442695
    %v534 = vpow.pop %v533
    %v535 = vadd.f32 %v534, 1.0
    %v536 = vrcp.pop %v535
    %v537 = vmul.f32 %v535, %v536
    %v538 = vsub.f32 1.0, %v537
    %v539 = vmul.f32 %v536, %v538
    %v540 = vadd.f32 %v536, %v539
    %vm541 = vweird.f32 %v535
    %vm542 = vweird.f32 %v536
    %vm543 = vmor %vm541, %vm542
    %v544 = vsel %vm543, %v536, %v540
    %v545 = vand.u32 2147483647, %v535
    %vm546 = vcmp.eq.f32.partialorder %v545, 8.507059e+37
    %v547 = vand.u32 %v535, 2147483648
    %v548 = vor.u32 1.1754944e-38, %v547
    %v549 = vsel %vm546, %v548, %v544
    %v550 = vmul.f32 1.0, %v549
    %v551 = vmul.f32 %v530, %v550
    %v552 = vld [vmem:[%s1 + $0x20] sm:$0xff]
    %v553 = vld [vmem:[%s1 + $0x28] sm:$0xff]
    %v554 = vld [vmem:[%s1 + $0x30] sm:$0xff]
    %v555 = vld [vmem:[%s1 + $0x38] sm:$0xff]
    %v556 = vperm.slane %v16, 0
    %v558 = vsel %vm343, %v551, 0
    %560 = vmatpush.msra.mxu0 0.0
    %561 = vmatpush.msra.mxu0 0.0
    %562 = vmatpush.msra.mxu0 0.0
    %563 = vmatpush.msra.mxu0 0.0
    %564 = vmatpush.msra.mxu0 0.0
    %565 = vmatpush.msra.mxu0 0.0
    %566 = vmatpush.msra.mxu0 0.0
    %567 = vmatpush.msra.mxu0 0.0
    %568 = vmatpush.msra.mxu0 0.0
    %569 = vmatpush.msra.mxu0 0.0
    %570 = vmatpush.msra.mxu0 0.0
    %571 = vmatpush.msra.mxu0 0.0
    %v572 = vand.u32 %v555, 4294901760
    %573 = vmatpush.msra.mxu0 %v572
    %v574 = vand.u32 %v554, 4294901760
    %575 = vmatpush.msra.mxu0 %v574
    %v576 = vand.u32 %v553, 4294901760
    %577 = vmatpush.msra.mxu0 %v576
    %v578 = vand.u32 %v552, 4294901760
    %579 = vmatpush.msra.mxu0 %v578
    %v580 = vand.u32 %v558, 4294901760
    %v581 = vsub.f32 %v558, %v580
    %v582 = vand.u32 %v581, 4294901760
    %v583 = vsub.f32 %v581, %v582
    %v584 = vand.u32 %v583, 4294901760
    %585 = vmatmul.f32.gmra.mxu0 %v584
    %v586 = vpop.f32.mrf.mxu0
    %v587 = vadd.f32 %v556, %v586
    %588 = vdwg.mxu0
    %589 = vmatpush.msra.mxu0 0.0
    %590 = vmatpush.msra.mxu0 0.0
    %591 = vmatpush.msra.mxu0 0.0
    %592 = vmatpush.msra.mxu0 0.0
    %593 = vmatpush.msra.mxu0 0.0
    %594 = vmatpush.msra.mxu0 0.0
    %595 = vmatpush.msra.mxu0 0.0
    %596 = vmatpush.msra.mxu0 0.0
    %597 = vmatpush.msra.mxu0 0.0
    %598 = vmatpush.msra.mxu0 0.0
    %599 = vmatpush.msra.mxu0 0.0
    %600 = vmatpush.msra.mxu0 0.0
    %v601 = vand.u32 %v555, 4294901760
    %v602 = vsub.f32 %v555, %v601
    %v603 = vand.u32 %v602, 4294901760
    %v604 = vsub.f32 %v602, %v603
    %v605 = vand.u32 %v604, 4294901760
    %606 = vmatpush.msra.mxu0 %v605
    %v607 = vand.u32 %v554, 4294901760
    %v608 = vsub.f32 %v554, %v607
    %v609 = vand.u32 %v608, 4294901760
    %v610 = vsub.f32 %v608, %v609
    %v611 = vand.u32 %v610, 4294901760
    %612 = vmatpush.msra.mxu0 %v611
    %v613 = vand.u32 %v553, 4294901760
    %v614 = vsub.f32 %v553, %v613
    %v615 = vand.u32 %v614, 4294901760
    %v616 = vsub.f32 %v614, %v615
    %v617 = vand.u32 %v616, 4294901760
    %618 = vmatpush.msra.mxu0 %v617
    %v619 = vand.u32 %v552, 4294901760
    %v620 = vsub.f32 %v552, %v619
    %v621 = vand.u32 %v620, 4294901760
    %v622 = vsub.f32 %v620, %v621
    %v623 = vand.u32 %v622, 4294901760
    %624 = vmatpush.msra.mxu0 %v623
    %v625 = vand.u32 %v558, 4294901760
    %626 = vmatmul.f32.gmra.mxu0 %v625
    %v627 = vpop.f32.mrf.mxu0
    %v628 = vadd.f32 %v587, %v627
    %629 = vdwg.mxu0
    %630 = vmatpush.msra.mxu0 0.0
    %631 = vmatpush.msra.mxu0 0.0
    %632 = vmatpush.msra.mxu0 0.0
    %633 = vmatpush.msra.mxu0 0.0
    %634 = vmatpush.msra.mxu0 0.0
    %635 = vmatpush.msra.mxu0 0.0
    %636 = vmatpush.msra.mxu0 0.0
    %637 = vmatpush.msra.mxu0 0.0
    %638 = vmatpush.msra.mxu0 0.0
    %639 = vmatpush.msra.mxu0 0.0
    %640 = vmatpush.msra.mxu0 0.0
    %641 = vmatpush.msra.mxu0 0.0
    %v642 = vand.u32 %v555, 4294901760
    %v643 = vsub.f32 %v555, %v642
    %644 = vmatpush.msra.mxu0 %v643
    %v645 = vand.u32 %v554, 4294901760
    %v646 = vsub.f32 %v554, %v645
    %647 = vmatpush.msra.mxu0 %v646
    %v648 = vand.u32 %v553, 4294901760
    %v649 = vsub.f32 %v553, %v648
    %650 = vmatpush.msra.mxu0 %v649
    %v651 = vand.u32 %v552, 4294901760
    %v652 = vsub.f32 %v552, %v651
    %653 = vmatpush.msra.mxu0 %v652
    %v654 = vand.u32 %v558, 4294901760
    %v655 = vsub.f32 %v558, %v654
    %656 = vmatmul.f32.gmra.mxu0 %v655
    %v657 = vpop.f32.mrf.mxu0
    %v658 = vadd.f32 %v628, %v657
    %659 = vdwg.mxu0
    %660 = vmatpush.msra.mxu0 0.0
    %661 = vmatpush.msra.mxu0 0.0
    %662 = vmatpush.msra.mxu0 0.0
    %663 = vmatpush.msra.mxu0 0.0
    %664 = vmatpush.msra.mxu0 0.0
    %665 = vmatpush.msra.mxu0 0.0
    %666 = vmatpush.msra.mxu0 0.0
    %667 = vmatpush.msra.mxu0 0.0
    %668 = vmatpush.msra.mxu0 0.0
    %669 = vmatpush.msra.mxu0 0.0
    %670 = vmatpush.msra.mxu0 0.0
    %671 = vmatpush.msra.mxu0 0.0
    %v672 = vand.u32 %v555, 4294901760
    %673 = vmatpush.msra.mxu0 %v672
    %v674 = vand.u32 %v554, 4294901760
    %675 = vmatpush.msra.mxu0 %v674
    %v676 = vand.u32 %v553, 4294901760
    %677 = vmatpush.msra.mxu0 %v676
    %v678 = vand.u32 %v552, 4294901760
    %679 = vmatpush.msra.mxu0 %v678
    %v680 = vand.u32 %v558, 4294901760
    %v681 = vsub.f32 %v558, %v680
    %v682 = vand.u32 %v681, 4294901760
    %683 = vmatmul.f32.gmra.mxu0 %v682
    %v684 = vpop.f32.mrf.mxu0
    %v685 = vadd.f32 %v658, %v684
    %686 = vdwg.mxu0
    %687 = vmatpush.msra.mxu0 0.0
    %688 = vmatpush.msra.mxu0 0.0
    %689 = vmatpush.msra.mxu0 0.0
    %690 = vmatpush.msra.mxu0 0.0
    %691 = vmatpush.msra.mxu0 0.0
    %692 = vmatpush.msra.mxu0 0.0
    %693 = vmatpush.msra.mxu0 0.0
    %694 = vmatpush.msra.mxu0 0.0
    %695 = vmatpush.msra.mxu0 0.0
    %696 = vmatpush.msra.mxu0 0.0
    %697 = vmatpush.msra.mxu0 0.0
    %698 = vmatpush.msra.mxu0 0.0
    %v699 = vand.u32 %v555, 4294901760
    %v700 = vsub.f32 %v555, %v699
    %v701 = vand.u32 %v700, 4294901760
    %702 = vmatpush.msra.mxu0 %v701
    %v703 = vand.u32 %v554, 4294901760
    %v704 = vsub.f32 %v554, %v703
    %v705 = vand.u32 %v704, 4294901760
    %706 = vmatpush.msra.mxu0 %v705
    %v707 = vand.u32 %v553, 4294901760
    %v708 = vsub.f32 %v553, %v707
    %v709 = vand.u32 %v708, 4294901760
    %710 = vmatpush.msra.mxu0 %v709
    %v711 = vand.u32 %v552, 4294901760
    %v712 = vsub.f32 %v552, %v711
    %v713 = vand.u32 %v712, 4294901760
    %714 = vmatpush.msra.mxu0 %v713
    %v715 = vand.u32 %v558, 4294901760
    %716 = vmatmul.f32.gmra.mxu0 %v715
    %v717 = vpop.f32.mrf.mxu0
    %v718 = vadd.f32 %v685, %v717
    %719 = vdwg.mxu0
    %720 = vmatpush.msra.mxu0 0.0
    %721 = vmatpush.msra.mxu0 0.0
    %722 = vmatpush.msra.mxu0 0.0
    %723 = vmatpush.msra.mxu0 0.0
    %724 = vmatpush.msra.mxu0 0.0
    %725 = vmatpush.msra.mxu0 0.0
    %726 = vmatpush.msra.mxu0 0.0
    %727 = vmatpush.msra.mxu0 0.0
    %728 = vmatpush.msra.mxu0 0.0
    %729 = vmatpush.msra.mxu0 0.0
    %730 = vmatpush.msra.mxu0 0.0
    %731 = vmatpush.msra.mxu0 0.0
    %v732 = vand.u32 %v555, 4294901760
    %733 = vmatpush.msra.mxu0 %v732
    %v734 = vand.u32 %v554, 4294901760
    %735 = vmatpush.msra.mxu0 %v734
    %v736 = vand.u32 %v553, 4294901760
    %737 = vmatpush.msra.mxu0 %v736
    %v738 = vand.u32 %v552, 4294901760
    %739 = vmatpush.msra.mxu0 %v738
    %v740 = vand.u32 %v558, 4294901760
    %741 = vmatmul.f32.gmra.mxu0 %v740
    %v742 = vpop.f32.mrf.mxu0
    %v743 = vadd.f32 %v718, %v742
    %744 = vdwg.mxu0
    %745 = vst.msk [vmem:[#allocation2] sm:$0xff] %vm343, %v743
    // Predicated region
    $region10: #{_time_embedding_call.1} parent=1 // pred_check
      _
    $region11: #{_time_embedding_call.1} parent=1 // pred_check_branch
      %747 = sbr.rel (0) target = $region13
    $region12: #{_time_embedding_call.1} parent=1 // pred_region
      %749 = vsyncadd [#allocation3], 0
      %s751 = sshll.u32 [#allocation2], 4
      %s752 = int_to_ptr.vmem [resolvable:$true] %s751
      %s753 = sshll.u32 %s2, 4
      %s754 = int_to_ptr.hbm [resolvable:$true] %s753
      %756 = dma.vmem_to_hbm [thread:$0]  %s752, 128, %s754, [#allocation3]
    $region13: #{_time_embedding_call.1} parent=1 // pred_fallthru
      _
    // Predicated region
    $region14: #{_time_embedding_call.1} parent=1 // pred_check
      _
    $region15: #{_time_embedding_call.1} parent=1 // pred_check_branch
      %758 = sbr.rel (0) target = $region17
    $region16: #{_time_embedding_call.1} parent=1 // pred_region
      %760 = dma.done [#allocation3], 128
    $region17: #{_time_embedding_call.1} parent=1 // pred_fallthru
      _
    %761 = vsyncpa [#allocation3], 1

</llo_original>
